<compile_context>
chip_gen: v7x
topology: tpu7x:2x2x1
jax: 0.10.0
libtpu: 0.0.40
codegen_flags: <defaults>
</compile_context>

<pallas_src>
import math

import jax
import jax.numpy as jnp
from jax.experimental import pallas as pl
from jax.experimental.pallas import tpu as pltpu


def _triple(v):
    return (v, v, v) if isinstance(v, int) else tuple(v)


# ----------------------------------------------------------------------------
# Pallas kernel: fused (patches_bf16 @ W_bf16) -> f32 acc -> BN affine -> ReLU
# ----------------------------------------------------------------------------
def _gemm_bn_relu_kernel(p_ref, w_ref, scale_ref, shift_ref, o_ref):
    acc = jnp.dot(p_ref[...], w_ref[...], preferred_element_type=jnp.float32)
    y = acc * scale_ref[...] + shift_ref[...]
    o_ref[...] = jnp.maximum(y, 0.0).astype(o_ref.dtype)


def gemm_bn_relu_pallas(patches, w, bn_scale, bn_shift, tm):
    """patches: [Mp, K] bf16, w: [K, Cout] bf16, bn_*: [Cout] f32. Mp % tm == 0."""
    Mp, K = patches.shape
    Cout = w.shape[1]
    assert Mp % tm == 0
    return pl.pallas_call(
        _gemm_bn_relu_kernel,
        out_shape=jax.ShapeDtypeStruct((Mp, Cout), jnp.float32),
        grid_spec=pltpu.PrefetchScalarGridSpec(
            num_scalar_prefetch=0,
            grid=(Mp // tm,),
            in_specs=[
                pl.BlockSpec((tm, K), lambda i: (i, 0)),    # patch tile (bf16)
                pl.BlockSpec((K, Cout), lambda i: (0, 0)),  # weight, VMEM-resident
                pl.BlockSpec((1, Cout), lambda i: (0, 0)),  # bn scale
                pl.BlockSpec((1, Cout), lambda i: (0, 0)),  # bn shift
            ],
            out_specs=pl.BlockSpec((tm, Cout), lambda i: (i, 0)),
        ),
        compiler_params=pltpu.CompilerParams(
            dimension_semantics=("parallel",)),
    )(patches, w,
      bn_scale.reshape(1, -1).astype(jnp.float32),
      bn_shift.reshape(1, -1).astype(jnp.float32))


# ----------------------------------------------------------------------------
# Sparse conv + BN + ReLU block on the compacted voxel representation
# ----------------------------------------------------------------------------
def sparse_conv_block(feats, coords, spatial, batch_size, w, bn_scale, bn_shift,
                      ksize, stride, padding, conv_type, tm=512):
    """feats: [N, Cin] f32, coords: [N, 4] int32 (b, z, y, x)."""
    ksize, stride, padding = _triple(ksize), _triple(stride), _triple(padding)
    kd, kh, kw = ksize
    sd, sh, sw = stride
    pd, ph, pw = padding
    D, H, W = spatial
    N, Cin = feats.shape
    Cout = w.shape[-1]
    T = kd * kh * kw

    # Dense int32 index grid over the *input* spatial shape: row index, or N
    # (sentinel pointing at an appended zero feature row).
    idx_grid = jnp.full((batch_size, D, H, W), N, jnp.int32)
    if N > 0:
        idx_grid = idx_grid.at[coords[:, 0], coords[:, 1], coords[:, 2],
                               coords[:, 3]].set(jnp.arange(N, dtype=jnp.int32))

    if conv_type == 'subm':
        out_coords = coords                         # submanifold: indices unchanged
        out_spatial = (D, H, W)
    else:                                           # 'spconv' downsample
        Do = (D + 2 * pd - kd) // sd + 1
        Ho = (H + 2 * ph - kh) // sh + 1
        Wo = (W + 2 * pw - kw) // sw + 1
        mask = idx_grid < N
        maskp = jnp.pad(mask, ((0, 0), (pd, pd), (ph, ph), (pw, pw)))
        out_mask = jnp.zeros((batch_size, Do, Ho, Wo), bool)
        for dz in range(kd):
            for dy in range(kh):
                for dx in range(kw):
                    out_mask = out_mask | maskp[:, dz:dz + Do * sd:sd,
                                                dy:dy + Ho * sh:sh,
                                                dx:dx + Wo * sw:sw]
        out_coords = jnp.stack(jnp.nonzero(out_mask), axis=1).astype(jnp.int32)
        out_spatial = (Do, Ho, Wo)

    M = int(out_coords.shape[0])
    if M == 0:
        return jnp.zeros((0, Cout), jnp.float32), out_coords, out_spatial

    # Tap offsets (dz, dy, dx) — order must match w.reshape(T*Cin, Cout).
    offs = [(dz, dy, dx) for dz in range(kd) for dy in range(kh) for dx in range(kw)]
    dzs = jnp.array([o[0] for o in offs], jnp.int32)
    dys = jnp.array([o[1] for o in offs], jnp.int32)
    dxs = jnp.array([o[2] for o in offs], jnp.int32)

    b = out_coords[:, 0:1]                                       # [M, 1]
    zi = out_coords[:, 1:2] * sd - pd + dzs[None, :]             # [M, T]
    yi = out_coords[:, 2:3] * sh - ph + dys[None, :]
    xi = out_coords[:, 3:4] * sw - pw + dxs[None, :]
    inb = (zi >= 0) & (zi < D) & (yi >= 0) & (yi < H) & (xi >= 0) & (xi < W)
    nbr = idx_grid[b,
                   jnp.clip(zi, 0, D - 1),
                   jnp.clip(yi, 0, H - 1),
                   jnp.clip(xi, 0, W - 1)]
    nbr = jnp.where(inb, nbr, N)                                  # [M, T]

    # Pad rows up to a tile multiple by padding the *index table* with the
    # zero-row sentinel (no extra HBM copy of the big patches array).
    Mp = ((M + tm - 1) // tm) * tm
    if Mp > M:
        nbr = jnp.concatenate([nbr, jnp.full((Mp - M, T), N, jnp.int32)], axis=0)

    feats_ext = jnp.concatenate(
        [feats.astype(jnp.bfloat16), jnp.zeros((1, Cin), jnp.bfloat16)], axis=0)
    patches = feats_ext[nbr].reshape(Mp, T * Cin)                 # [Mp, T*Cin] bf16

    w2 = w.reshape(T * Cin, Cout).astype(jnp.bfloat16)
    out = gemm_bn_relu_pallas(patches, w2, bn_scale, bn_shift, tm)
    return out[:M], out_coords, out_spatial


# ----------------------------------------------------------------------------
# Sparse <-> dense conversion glue
# ----------------------------------------------------------------------------
def sparsify_input(voxel_features, voxel_coords, batch_size, sparse_shape):
    """voxel_coords: [N, 4] int32 = [batch_idx, z, y, x] -> compacted (feats, coords)."""
    D, H, W = sparse_shape
    C = voxel_features.shape[1]
    b, z, y, x = (voxel_coords[:, 0], voxel_coords[:, 1],
                  voxel_coords[:, 2], voxel_coords[:, 3])
    dense = jnp.zeros((batch_size, D, H, W, C), jnp.float32)
    dense = dense.at[b, z, y, x].set(voxel_features.astype(jnp.float32))
    mask = jnp.zeros((batch_size, D, H, W), bool).at[b, z, y, x].set(True)
    coords = jnp.stack(jnp.nonzero(mask), axis=1).astype(jnp.int32)
    feats = dense[coords[:, 0], coords[:, 1], coords[:, 2], coords[:, 3]]
    return feats, coords


def densify_sparse(feats, coords, batch_size, spatial):
    D, H, W = spatial
    C = feats.shape[1]
    dense = jnp.zeros((batch_size, D, H, W, C), jnp.float32)
    if feats.shape[0] > 0:
        dense = dense.at[coords[:, 0], coords[:, 1], coords[:, 2],
                         coords[:, 3]].set(feats.astype(jnp.float32))
    return dense


# ----------------------------------------------------------------------------
# Backbone definition (default cfg: residual convs 'subm', downsamples 'spconv',
# so the SpatialPruned* branches are never instantiated).
# ----------------------------------------------------------------------------
# (name, cin, cout, kernel, stride, padding, conv_type)
def make_layer_defs(input_channels):
    return [
        ('conv_input', input_channels, 16, 3, 1, 1, 'subm'),
        ('conv1_0',    16, 16, 3, 1, 1, 'subm'),
        ('conv2_0',    16, 32, 3, 2, 1, 'spconv'),
        ('conv2_1',    32, 32, 3, 1, 1, 'subm'),
        ('conv2_2',    32, 32, 3, 1, 1, 'subm'),
        ('conv3_0',    32, 64, 3, 2, 1, 'spconv'),
        ('conv3_1',    64, 64, 3, 1, 1, 'subm'),
        ('conv3_2',    64, 64, 3, 1, 1, 'subm'),
        ('conv4_0',    64, 64, 3, 2, (0, 1, 1), 'spconv'),
        ('conv4_1',    64, 64, 3, 1, 1, 'subm'),
        ('conv4_2',    64, 64, 3, 1, 1, 'subm'),
        ('conv_out',   64, 128, (3, 1, 1), (2, 1, 1), 0, 'spconv'),
    ]


def init_params(key, layer_defs, bn_eps=1e-3):
    """Synthetic weights: conv W [kd,kh,kw,Cin,Cout]; BN folded with running stats."""
    params = []
    for (_, cin, cout, k, _, _, _) in layer_defs:
        kd, kh, kw = _triple(k)
        key, kw_, kg_, kb_ = jax.random.split(key, 4)
        fan_in = kd * kh * kw * cin
        w = jax.random.normal(kw_, (kd, kh, kw, cin, cout), jnp.float32)
        w = w * math.sqrt(2.0 / fan_in)
        gamma = 1.0 + 0.1 * jax.random.normal(kg_, (cout,), jnp.float32)
        beta = 0.05 * jax.random.normal(kb_, (cout,), jnp.float32)
        running_mean = jnp.zeros((cout,), jnp.float32)
        running_var = jnp.ones((cout,), jnp.float32)
        scale = gamma / jnp.sqrt(running_var + bn_eps)
        shift = beta - running_mean * scale          # correct eval-mode BN fold
        params.append((w, scale, shift))
    return params


def voxel_pruning_backbone8x_forward(batch_dict, params, layer_defs, sparse_shape,
                                     tm=512):
    batch_size = batch_dict['batch_size']
    feats, coords = sparsify_input(batch_dict['voxel_features'],
                                   batch_dict['voxel_coords'],
                                   batch_size, sparse_shape)
    spatial = tuple(sparse_shape)

    batch_dict = dict(batch_dict)
    batch_dict['loss_box_of_pts'] = 0
    batch_dict['l1_loss'] = 0
    batch_dict['loss_box_of_pts_sprs'] = 0
    batch_dict['3dbackbone_flops'] = 0

    multi_scale = {}
    checkpoints = {'conv1_0': 'x_conv1', 'conv2_2': 'x_conv2',
                   'conv3_2': 'x_conv3', 'conv4_2': 'x_conv4'}
    for (name, _, _, k, s, p, ctype), (w, scale, shift) in zip(layer_defs, params):
        feats, coords, spatial = sparse_conv_block(
            feats, coords, spatial, batch_size, w, scale, shift, k, s, p, ctype, tm=tm)
        if name in checkpoints:
            # dense-equivalent of the spconv tensor (zeros at inactive sites)
            multi_scale[checkpoints[name]] = densify_sparse(
                feats, coords, batch_size, spatial)

    batch_dict['encoded_spconv_tensor'] = densify_sparse(
        feats, coords, batch_size, spatial)           # dense [B, Do, Ho, Wo, 128]
    batch_dict['encoded_spconv_tensor_stride'] = 8
    batch_dict['multi_scale_3d_features'] = multi_scale
    batch_dict['multi_scale_3d_strides'] = {'x_conv1': 1, 'x_conv2': 2,
                                            'x_conv3': 4, 'x_conv4': 8}
    return batch_dict


# ----------------------------------------------------------------------------
# Demo
# ----------------------------------------------------------------------------
if __name__ == "__main__":
    key = jax.random.PRNGKey(0)

    # Small synthetic voxel grid: grid_size = [W, H, Dz] = [16, 16, 24]
    # sparse_shape = grid_size[::-1] + [1, 0, 0] = [25, 16, 16]
    grid_size = [16, 16, 24]
    sparse_shape = (grid_size[2] + 1, grid_size[1], grid_size[0])  # (D, H, W)
    input_channels = 4
    batch_size = 2
    num_voxels = 200

    k_feat, k_b, k_z, k_y, k_x, k_param = jax.random.split(key, 6)
    voxel_features = jax.random.normal(k_feat, (num_voxels, input_channels), jnp.float32)
    voxel_coords = jnp.stack([
        jax.random.randint(k_b, (num_voxels,), 0, batch_size),
        jax.random.randint(k_z, (num_voxels,), 0, sparse_shape[0]),
        jax.random.randint(k_y, (num_voxels,), 0, sparse_shape[1]),
        jax.random.randint(k_x, (num_voxels,), 0, sparse_shape[2]),
    ], axis=1).astype(jnp.int32)

    layer_defs = make_layer_defs(input_channels)
    params = init_params(k_param, layer_defs)

    batch_dict = {
        'voxel_features': voxel_features,
        'voxel_coords': voxel_coords,
        'batch_size': batch_size,
    }

    out_dict = voxel_pruning_backbone8x_forward(batch_dict, params, layer_defs,
                                                sparse_shape, tm=512)
    jax.block_until_ready(out_dict['encoded_spconv_tensor'])
    for v in out_dict['multi_scale_3d_features'].values():
        jax.block_until_ready(v)

    print("KERNEL_OK")
</pallas_src>

<mosaic_0001>
module attributes {stable_mosaic.version = 11 : i64} {
  func.func @_gemm_bn_relu_kernel(%arg0: i32, %arg1: memref<512x108xbf16, #tpu.memory_space<vmem>>, %arg2: memref<108x16xbf16, #tpu.memory_space<vmem>>, %arg3: memref<1x16xf32, #tpu.memory_space<vmem>>, %arg4: memref<1x16xf32, #tpu.memory_space<vmem>>, %arg5: memref<512x16xf32, #tpu.memory_space<vmem>>) attributes {dimension_semantics = [#tpu.dimension_semantics<parallel>], iteration_bounds = array<i64: 1>, scalar_prefetch = 0 : i64, scratch_operands = 0 : i64, tpu.core_type = #tpu.core_type<tc>, window_params = [{transform_indices = @transform_0, window_bounds = array<i64: 512, 108>}, {pipeline_mode = #tpu.pipeline_mode<synchronous>, transform_indices = @transform_1, window_bounds = array<i64: 108, 16>}, {pipeline_mode = #tpu.pipeline_mode<synchronous>, transform_indices = @transform_2, window_bounds = array<i64: 1, 16>}, {pipeline_mode = #tpu.pipeline_mode<synchronous>, transform_indices = @transform_3, window_bounds = array<i64: 1, 16>}, {transform_indices = @transform_4, window_bounds = array<i64: 512, 16>}]} {
    %c0 = arith.constant 0 : index
    %c0_0 = arith.constant 0 : index
    %0 = vector.load %arg1[%c0, %c0_0] : memref<512x108xbf16, #tpu.memory_space<vmem>>, vector<512x108xbf16>
    %c0_1 = arith.constant 0 : index
    %c0_2 = arith.constant 0 : index
    %1 = vector.load %arg2[%c0_1, %c0_2] : memref<108x16xbf16, #tpu.memory_space<vmem>>, vector<108x16xbf16>
    %cst = arith.constant dense<0.000000e+00> : vector<512x16xf32>
    %2 = tpu.matmul %0, %1, %cst {dimension_numbers = #tpu.dot_dimension_numbers<[1], [0], [0], [1], [0, 0, 1, 1], [], []>} : vector<512x108xbf16>, vector<108x16xbf16>, vector<512x16xf32> -> vector<512x16xf32>
    %c0_3 = arith.constant 0 : index
    %c0_4 = arith.constant 0 : index
    %3 = vector.load %arg3[%c0_3, %c0_4] : memref<1x16xf32, #tpu.memory_space<vmem>>, vector<1x16xf32>
    %4 = vector.broadcast %3 : vector<1x16xf32> to vector<512x16xf32>
    %5 = arith.mulf %2, %4 : vector<512x16xf32>
    %c0_5 = arith.constant 0 : index
    %c0_6 = arith.constant 0 : index
    %6 = vector.load %arg4[%c0_5, %c0_6] : memref<1x16xf32, #tpu.memory_space<vmem>>, vector<1x16xf32>
    %7 = vector.broadcast %6 : vector<1x16xf32> to vector<512x16xf32>
    %8 = arith.addf %5, %7 : vector<512x16xf32>
    %cst_7 = arith.constant 0.000000e+00 : f32
    %9 = vector.broadcast %cst_7 : f32 to vector<512x16xf32>
    %10 = arith.maximumf %8, %9 : vector<512x16xf32>
    %c0_8 = arith.constant 0 : index
    %c0_9 = arith.constant 0 : index
    %11 = vector.load %arg5[%c0_8, %c0_9] : memref<512x16xf32, #tpu.memory_space<vmem>>, vector<512x16xf32>
    tpu.vector_store %arg5[%c0_8, %c0_9], %10 {strides = array<i32>} : memref<512x16xf32, #tpu.memory_space<vmem>>, vector<512x16xf32>,
    return
  }
  func.func @transform_0(%arg0: i32) -> (i32, i32) {
    %c0_i32 = arith.constant 0 : i32
    %c0_i32_0 = arith.constant 0 : i32
    return %arg0, %c0_i32 : i32, i32
  }
  func.func @transform_1(%arg0: i32) -> (i32, i32) {
    %c0_i32 = arith.constant 0 : i32
    %c0_i32_0 = arith.constant 0 : i32
    %c0_i32_1 = arith.constant 0 : i32
    return %c0_i32, %c0_i32_0 : i32, i32
  }
  func.func @transform_2(%arg0: i32) -> (i32, i32) {
    %c0_i32 = arith.constant 0 : i32
    %c0_i32_0 = arith.constant 0 : i32
    %c0_i32_1 = arith.constant 0 : i32
    return %c0_i32, %c0_i32_0 : i32, i32
  }
  func.func @transform_3(%arg0: i32) -> (i32, i32) {
    %c0_i32 = arith.constant 0 : i32
    %c0_i32_0 = arith.constant 0 : i32
    %c0_i32_1 = arith.constant 0 : i32
    return %c0_i32, %c0_i32_0 : i32, i32
  }
  func.func @transform_4(%arg0: i32) -> (i32, i32) {
    %c0_i32 = arith.constant 0 : i32
    %c0_i32_0 = arith.constant 0 : i32
    return %arg0, %c0_i32 : i32, i32
  }
}

</mosaic_0001>

<llo_original>
// kernel: tpu_custom_call.1
$region0: #{tpu_custom_call.1}
  #allocation0 [shape = 'u32[]', space=smem, size = 0x4, offset = 0x4, fixed_abs, tag = 'smem constant byte address 0x4 - core index']
  #allocation1 [shape = 'u32[144,128]{1,0:T(1,128)}', space=vmem, size = 0x12000, scoped, tag = 'internal scratch']
  %s0 = inlined_call_operand.vmem [shape: bf16[512,108], index: 0, kind: input, shape index: {}]
  %s1 = inlined_call_operand.vmem [shape: bf16[108,16], index: 1, kind: input, shape index: {}]
  %s2 = inlined_call_operand.vmem [shape: f32[1,16], index: 2, kind: input, shape index: {}]
  %s3 = inlined_call_operand.vmem [shape: f32[1,16], index: 3, kind: input, shape index: {}]
  %s4 = inlined_call_operand.vmem [shape: f32[512,16], index: 4, kind: output, shape index: {}]
  %s5 = sld [smem:[#allocation0]]
  $region26: #{tpu_custom_call.1} parent=0
    _
  %s7 = ssub.s32 1, %s5
  %s8 = scalar_select 0, %s7, %s5
  // Predicated region
  $region2: #{tpu_custom_call.1} parent=0 // pred_check
    _
  $region3: #{tpu_custom_call.1} parent=0 // pred_check_branch
    %10 = sbr.rel (0) target = $region5
  $region4: #{tpu_custom_call.1} parent=0 // pred_region
    _
  $region5: #{tpu_custom_call.1} parent=0 // pred_fallthru
    _
  // Predicated region
  $region6: #{tpu_custom_call.1} parent=0 // pred_check
    _
  $region7: #{tpu_custom_call.1} parent=0 // pred_check_branch
    %12 = sbr.rel (0) target = $region9
  $region8: #{tpu_custom_call.1} parent=0 // pred_region
    _
  $region9: #{tpu_custom_call.1} parent=0 // pred_fallthru
    _
  // Predicated region
  $region10: #{tpu_custom_call.1} parent=0 // pred_check
    _
  $region11: #{tpu_custom_call.1} parent=0 // pred_check_branch
    %14 = sbr.rel (0) target = $region13
  $region12: #{tpu_custom_call.1} parent=0 // pred_region
    _
  $region13: #{tpu_custom_call.1} parent=0 // pred_fallthru
    _
  // Predicated region
  $region14: #{tpu_custom_call.1} parent=0 // pred_check
    _
  $region15: #{tpu_custom_call.1} parent=0 // pred_check_branch
    %16 = sbr.rel (0) target = $region17
  $region16: #{tpu_custom_call.1} parent=0 // pred_region
    _
  $region17: #{tpu_custom_call.1} parent=0 // pred_fallthru
    _
  %v18 = vld [vmem:[%s0] sm:$0xf]
  %v19 = vld [vmem:[%s0 + $0x4] sm:$0xf]
  %v20 = vld [vmem:[%s0 + $0x8] sm:$0xf]
  %v21 = vld [vmem:[%s0 + $0xc] sm:$0xf]
  %v22 = vld [vmem:[%s0 + $0x10] sm:$0xf]
  %v23 = vld [vmem:[%s0 + $0x14] sm:$0xf]
  %v24 = vld [vmem:[%s0 + $0x18] sm:$0xf]
  %v25 = vld [vmem:[%s0 + $0x1c] sm:$0xf]
  %v26 = vld [vmem:[%s0 + $0x20] sm:$0xf]
  %v27 = vld [vmem:[%s0 + $0x24] sm:$0xf]
  %v28 = vld [vmem:[%s0 + $0x28] sm:$0xf]
  %v29 = vld [vmem:[%s0 + $0x2c] sm:$0xf]
  %v30 = vld [vmem:[%s0 + $0x30] sm:$0xf]
  %v31 = vld [vmem:[%s0 + $0x34] sm:$0xf]
  %v32 = vld [vmem:[%s0 + $0x38] sm:$0xf]
  %v33 = vld [vmem:[%s0 + $0x3c] sm:$0xf]
  %v34 = vld [vmem:[%s0 + $0x40] sm:$0xf]
  %v35 = vld [vmem:[%s0 + $0x44] sm:$0xf]
  %v36 = vld [vmem:[%s0 + $0x48] sm:$0xf]
  %v37 = vld [vmem:[%s0 + $0x4c] sm:$0xf]
  %v38 = vld [vmem:[%s0 + $0x50] sm:$0xf]
  %v39 = vld [vmem:[%s0 + $0x54] sm:$0xf]
  %v40 = vld [vmem:[%s0 + $0x58] sm:$0xf]
  %v41 = vld [vmem:[%s0 + $0x5c] sm:$0xf]
  %v42 = vld [vmem:[%s0 + $0x60] sm:$0xf]
  %v43 = vld [vmem:[%s0 + $0x64] sm:$0xf]
  %v44 = vld [vmem:[%s0 + $0x68] sm:$0xf]
  %v45 = vld [vmem:[%s0 + $0x6c] sm:$0xf]
  %v46 = vld [vmem:[%s0 + $0x70] sm:$0xf]
  %v47 = vld [vmem:[%s0 + $0x74] sm:$0xf]
  %v48 = vld [vmem:[%s0 + $0x78] sm:$0xf]
  %v49 = vld [vmem:[%s0 + $0x7c] sm:$0xf]
  %v50 = vld [vmem:[%s0 + $0x80] sm:$0xf]
  %v51 = vld [vmem:[%s0 + $0x84] sm:$0xf]
  %v52 = vld [vmem:[%s0 + $0x88] sm:$0xf]
  %v53 = vld [vmem:[%s0 + $0x8c] sm:$0xf]
  %v54 = vld [vmem:[%s0 + $0x90] sm:$0xf]
  %v55 = vld [vmem:[%s0 + $0x94] sm:$0xf]
  %v56 = vld [vmem:[%s0 + $0x98] sm:$0xf]
  %v57 = vld [vmem:[%s0 + $0x9c] sm:$0xf]
  %v58 = vld [vmem:[%s0 + $0xa0] sm:$0xf]
  %v59 = vld [vmem:[%s0 + $0xa4] sm:$0xf]
  %v60 = vld [vmem:[%s0 + $0xa8] sm:$0xf]
  %v61 = vld [vmem:[%s0 + $0xac] sm:$0xf]
  %v62 = vld [vmem:[%s0 + $0xb0] sm:$0xf]
  %v63 = vld [vmem:[%s0 + $0xb4] sm:$0xf]
  %v64 = vld [vmem:[%s0 + $0xb8] sm:$0xf]
  %v65 = vld [vmem:[%s0 + $0xbc] sm:$0xf]
  %v66 = vld [vmem:[%s0 + $0xc0] sm:$0xf]
  %v67 = vld [vmem:[%s0 + $0xc4] sm:$0xf]
  %v68 = vld [vmem:[%s0 + $0xc8] sm:$0xf]
  %v69 = vld [vmem:[%s0 + $0xcc] sm:$0xf]
  %v70 = vld [vmem:[%s0 + $0xd0] sm:$0xf]
  %v71 = vld [vmem:[%s0 + $0xd4] sm:$0xf]
  %v72 = vld [vmem:[%s0 + $0xd8] sm:$0xf]
  %v73 = vld [vmem:[%s0 + $0xdc] sm:$0xf]
  %v74 = vld [vmem:[%s0 + $0xe0] sm:$0xf]
  %v75 = vld [vmem:[%s0 + $0xe4] sm:$0xf]
  %v76 = vld [vmem:[%s0 + $0xe8] sm:$0xf]
  %v77 = vld [vmem:[%s0 + $0xec] sm:$0xf]
  %v78 = vld [vmem:[%s0 + $0xf0] sm:$0xf]
  %v79 = vld [vmem:[%s0 + $0xf4] sm:$0xf]
  %v80 = vld [vmem:[%s0 + $0xf8] sm:$0xf]
  %v81 = vld [vmem:[%s0 + $0xfc] sm:$0xf]
  %v82 = vld [vmem:[%s1] sm:$0xf]
  %v83 = vld [vmem:[%s1 + $0x4] sm:$0xf]
  %v84 = vld [vmem:[%s1 + $0x8] sm:$0xf]
  %v85 = vld [vmem:[%s1 + $0xc] sm:$0xf]
  %v86 = vld [vmem:[%s1 + $0x10] sm:$0xf]
  %v87 = vld [vmem:[%s1 + $0x14] sm:$0xf]
  %v88 = vld [vmem:[%s1 + $0x18] sm:$0xf]
  %v89 = vld [vmem:[%s1 + $0x1c] sm:$0xf]
  %v90 = vld [vmem:[%s1 + $0x20] sm:$0xf]
  %v91 = vld [vmem:[%s1 + $0x24] sm:$0xf]
  %v92 = vld [vmem:[%s1 + $0x28] sm:$0xf]
  %v93 = vld [vmem:[%s1 + $0x2c] sm:$0xf]
  %v94 = vld [vmem:[%s1 + $0x30] sm:$0xf]
  %v95 = vld [vmem:[%s1 + $0x34] sm:$0x3]
  %v160 = vunpack.c.l.b16 %v18
  %v161 = vunpack.c.l.b16 %v19
  %v162 = vunpack.c.l.b16 %v20
  %v163 = vunpack.c.l.b16 %v21
  %v164 = vunpack.c.l.b16 %v22
  %v165 = vunpack.c.l.b16 %v23
  %v166 = vunpack.c.l.b16 %v24
  %v167 = vunpack.c.l.b16 %v25
  %v168 = vunpack.c.l.b16 %v26
  %v169 = vunpack.c.l.b16 %v27
  %v170 = vunpack.c.l.b16 %v28
  %v171 = vunpack.c.l.b16 %v29
  %v172 = vunpack.c.l.b16 %v30
  %v173 = vunpack.c.l.b16 %v31
  %v174 = vunpack.c.l.b16 %v32
  %v175 = vunpack.c.l.b16 %v33
  %v176 = vunpack.c.l.b16 %v34
  %v177 = vunpack.c.l.b16 %v35
  %v178 = vunpack.c.l.b16 %v36
  %v179 = vunpack.c.l.b16 %v37
  %v180 = vunpack.c.l.b16 %v38
  %v181 = vunpack.c.l.b16 %v39
  %v182 = vunpack.c.l.b16 %v40
  %v183 = vunpack.c.l.b16 %v41
  %v184 = vunpack.c.l.b16 %v42
  %v185 = vunpack.c.l.b16 %v43
  %v186 = vunpack.c.l.b16 %v44
  %v187 = vunpack.c.l.b16 %v45
  %v188 = vunpack.c.l.b16 %v46
  %v189 = vunpack.c.l.b16 %v47
  %v190 = vunpack.c.l.b16 %v48
  %v191 = vunpack.c.l.b16 %v49
  %v192 = vunpack.c.l.b16 %v50
  %v193 = vunpack.c.l.b16 %v51
  %v194 = vunpack.c.l.b16 %v52
  %v195 = vunpack.c.l.b16 %v53
  %v196 = vunpack.c.l.b16 %v54
  %v197 = vunpack.c.l.b16 %v55
  %v198 = vunpack.c.l.b16 %v56
  %v199 = vunpack.c.l.b16 %v57
  %v200 = vunpack.c.l.b16 %v58
  %v201 = vunpack.c.l.b16 %v59
  %v202 = vunpack.c.l.b16 %v60
  %v203 = vunpack.c.l.b16 %v61
  %v204 = vunpack.c.l.b16 %v62
  %v205 = vunpack.c.l.b16 %v63
  %v206 = vunpack.c.l.b16 %v64
  %v207 = vunpack.c.l.b16 %v65
  %v208 = vunpack.c.l.b16 %v66
  %v209 = vunpack.c.l.b16 %v67
  %v210 = vunpack.c.l.b16 %v68
  %v211 = vunpack.c.l.b16 %v69
  %v212 = vunpack.c.l.b16 %v70
  %v213 = vunpack.c.l.b16 %v71
  %v214 = vunpack.c.l.b16 %v72
  %v215 = vunpack.c.l.b16 %v73
  %v216 = vunpack.c.l.b16 %v74
  %v217 = vunpack.c.l.b16 %v75
  %v218 = vunpack.c.l.b16 %v76
  %v219 = vunpack.c.l.b16 %v77
  %v220 = vunpack.c.l.b16 %v78
  %v221 = vunpack.c.l.b16 %v79
  %v222 = vunpack.c.l.b16 %v80
  %v223 = vunpack.c.l.b16 %v81
  %v224 = vpack.c.b16 %v161, %v160
  %v225 = vpack.c.b16 %v163, %v162
  %v226 = vpack.c.b16 %v165, %v164
  %v227 = vpack.c.b16 %v167, %v166
  %v228 = vpack.c.b16 %v169, %v168
  %v229 = vpack.c.b16 %v171, %v170
  %v230 = vpack.c.b16 %v173, %v172
  %v231 = vpack.c.b16 %v175, %v174
  %v232 = vpack.c.b16 %v177, %v176
  %v233 = vpack.c.b16 %v179, %v178
  %v234 = vpack.c.b16 %v181, %v180
  %v235 = vpack.c.b16 %v183, %v182
  %v236 = vpack.c.b16 %v185, %v184
  %v237 = vpack.c.b16 %v187, %v186
  %v238 = vpack.c.b16 %v189, %v188
  %v239 = vpack.c.b16 %v191, %v190
  %v240 = vpack.c.b16 %v193, %v192
  %v241 = vpack.c.b16 %v195, %v194
  %v242 = vpack.c.b16 %v197, %v196
  %v243 = vpack.c.b16 %v199, %v198
  %v244 = vpack.c.b16 %v201, %v200
  %v245 = vpack.c.b16 %v203, %v202
  %v246 = vpack.c.b16 %v205, %v204
  %v247 = vpack.c.b16 %v207, %v206
  %v248 = vpack.c.b16 %v209, %v208
  %v249 = vpack.c.b16 %v211, %v210
  %v250 = vpack.c.b16 %v213, %v212
  %v251 = vpack.c.b16 %v215, %v214
  %v252 = vpack.c.b16 %v217, %v216
  %v253 = vpack.c.b16 %v219, %v218
  %v254 = vpack.c.b16 %v221, %v220
  %v255 = vpack.c.b16 %v223, %v222
  %v270 = vunpack.c.l.b16 %v82
  %v271 = vunpack.c.l.b16 %v83
  %v272 = vunpack.c.l.b16 %v84
  %v273 = vunpack.c.l.b16 %v85
  %v274 = vunpack.c.l.b16 %v86
  %v275 = vunpack.c.l.b16 %v87
  %v276 = vunpack.c.l.b16 %v88
  %v277 = vunpack.c.l.b16 %v89
  %v278 = vunpack.c.l.b16 %v90
  %v279 = vunpack.c.l.b16 %v91
  %v280 = vunpack.c.l.b16 %v92
  %v281 = vunpack.c.l.b16 %v93
  %v282 = vunpack.c.l.b16 %v94
  %v283 = vunpack.c.l.b16 %v95
  %v284 = vpack.c.b16 %v271, %v270
  %v285 = vpack.c.b16 %v273, %v272
  %v286 = vpack.c.b16 %v275, %v274
  %v287 = vpack.c.b16 %v277, %v276
  %v288 = vpack.c.b16 %v279, %v278
  %v289 = vpack.c.b16 %v281, %v280
  %v290 = vpack.c.b16 %v283, %v282
  %vm297 = vcmask 883712
  %v299 = vsel %vm297, %v224, 0
  %v302 = vsel %vm297, %v225, 0
  %v305 = vsel %vm297, %v226, 0
  %v308 = vsel %vm297, %v227, 0
  %v311 = vsel %vm297, %v228, 0
  %v314 = vsel %vm297, %v229, 0
  %v317 = vsel %vm297, %v230, 0
  %v320 = vsel %vm297, %v231, 0
  %v323 = vsel %vm297, %v232, 0
  %v326 = vsel %vm297, %v233, 0
  %v329 = vsel %vm297, %v234, 0
  %v332 = vsel %vm297, %v235, 0
  %v335 = vsel %vm297, %v236, 0
  %v338 = vsel %vm297, %v237, 0
  %v341 = vsel %vm297, %v238, 0
  %v344 = vsel %vm297, %v239, 0
  %v347 = vsel %vm297, %v240, 0
  %v350 = vsel %vm297, %v241, 0
  %v353 = vsel %vm297, %v242, 0
  %v356 = vsel %vm297, %v243, 0
  %v359 = vsel %vm297, %v244, 0
  %v362 = vsel %vm297, %v245, 0
  %v365 = vsel %vm297, %v246, 0
  %v368 = vsel %vm297, %v247, 0
  %v371 = vsel %vm297, %v248, 0
  %v374 = vsel %vm297, %v249, 0
  %v377 = vsel %vm297, %v250, 0
  %v380 = vsel %vm297, %v251, 0
  %v383 = vsel %vm297, %v252, 0
  %v386 = vsel %vm297, %v253, 0
  %v389 = vsel %vm297, %v254, 0
  %v392 = vsel %vm297, %v255, 0
  %vm394 = vcmask 1045504
  %v396 = vsel %vm394, %v290, 0
  %398 = vmatprep.subr.bf16.mxu0 0
  %399 = vmatpush1.bf16.msra.mxu0 %v284
  %400 = vmatprep.subr.bf16.mxu0 0
  %401 = vmatpush1.bf16.msra.mxu0 %v285
  %402 = vmatprep.subr.bf16.mxu0 0
  %403 = vmatpush1.bf16.msra.mxu0 %v286
  %404 = vmatprep.subr.bf16.mxu0 0
  %405 = vmatpush1.bf16.msra.mxu0 %v287
  %406 = vmatprep.subr.bf16.mxu0 0
  %407 = vmatpush1.bf16.msra.mxu0 %v288
  %408 = vmatprep.subr.bf16.mxu0 0
  %409 = vmatpush1.bf16.msra.mxu0 %v289
  %410 = vmatprep.subr.bf16.mxu0 0
  %411 = vmatpush1.bf16.msra.mxu0 %v396
  %412 = vmatprep.subr.bf16.mxu0 0
  %413 = vmatpush1.bf16.msra.mxu0 0
  %414 = vmatprep.subr.bf16.mxu0 0
  %415 = vmatpush1.bf16.msra.mxu0 0
  %416 = vmatprep.subr.bf16.mxu0 0
  %417 = vmatpush1.bf16.msra.mxu0 0
  %418 = vmatprep.subr.bf16.mxu0 0
  %419 = vmatpush1.bf16.msra.mxu0 0
  %420 = vmatprep.subr.bf16.mxu0 0
  %421 = vmatpush1.bf16.msra.mxu0 0
  %422 = vmatprep.subr.bf16.mxu0 0
  %423 = vmatpush1.bf16.msra.mxu0 0
  %424 = vmatprep.subr.bf16.mxu0 0
  %425 = vmatpush1.bf16.msra.mxu0 0
  %426 = vmatprep.subr.bf16.mxu0 0
  %427 = vmatpush1.bf16.msra.mxu0 0
  %428 = vmatprep.subr.bf16.mxu0 0
  %429 = vmatpush1.bf16.msra.mxu0 0
  %430 = vmatprep.mubr.bf16.mxu0 0
  %431 = vmatmul.mubr.bf16.gmra.mrb[0].mxu0 %v299
  %v432 = vpop.f32.mrb[0].mxu0
  %v433 = vadd.f32 0.0, %v432
  %v434 = vpop.f32.mrb[0].mxu0
  %v435 = vpop.f32.mrb[0].mxu0
  %v436 = vadd.f32 0.0, %v435
  %v437 = vpop.f32.mrb[0].mxu0
  %438 = vmatprep.mubr.bf16.mxu0 0
  %439 = vmatmul.mubr.bf16.gmra.mrb[0].mxu0 %v302
  %v440 = vpop.f32.mrb[0].mxu0
  %v441 = vadd.f32 0.0, %v440
  %v442 = vpop.f32.mrb[0].mxu0
  %v443 = vpop.f32.mrb[0].mxu0
  %v444 = vadd.f32 0.0, %v443
  %v445 = vpop.f32.mrb[0].mxu0
  %446 = vmatprep.mubr.bf16.mxu0 0
  %447 = vmatmul.mubr.bf16.gmra.mrb[0].mxu0 %v305
  %v448 = vpop.f32.mrb[0].mxu0
  %v449 = vadd.f32 0.0, %v448
  %v450 = vpop.f32.mrb[0].mxu0
  %v451 = vpop.f32.mrb[0].mxu0
  %v452 = vadd.f32 0.0, %v451
  %v453 = vpop.f32.mrb[0].mxu0
  %454 = vmatprep.mubr.bf16.mxu0 0
  %455 = vmatmul.mubr.bf16.gmra.mrb[0].mxu0 %v308
  %v456 = vpop.f32.mrb[0].mxu0
  %v457 = vadd.f32 0.0, %v456
  %v458 = vpop.f32.mrb[0].mxu0
  %v459 = vpop.f32.mrb[0].mxu0
  %v460 = vadd.f32 0.0, %v459
  %v461 = vpop.f32.mrb[0].mxu0
  %462 = vmatprep.mubr.bf16.mxu0 0
  %463 = vmatmul.mubr.bf16.gmra.mrb[0].mxu0 %v311
  %v464 = vpop.f32.mrb[0].mxu0
  %v465 = vadd.f32 0.0, %v464
  %v466 = vpop.f32.mrb[0].mxu0
  %v467 = vpop.f32.mrb[0].mxu0
  %v468 = vadd.f32 0.0, %v467
  %v469 = vpop.f32.mrb[0].mxu0
  %470 = vmatprep.mubr.bf16.mxu0 0
  %471 = vmatmul.mubr.bf16.gmra.mrb[0].mxu0 %v314
  %v472 = vpop.f32.mrb[0].mxu0
  %v473 = vadd.f32 0.0, %v472
  %v474 = vpop.f32.mrb[0].mxu0
  %v475 = vpop.f32.mrb[0].mxu0
  %v476 = vadd.f32 0.0, %v475
  %v477 = vpop.f32.mrb[0].mxu0
  %478 = vmatprep.mubr.bf16.mxu0 0
  %479 = vmatmul.mubr.bf16.gmra.mrb[0].mxu0 %v317
  %v480 = vpop.f32.mrb[0].mxu0
  %v481 = vadd.f32 0.0, %v480
  %v482 = vpop.f32.mrb[0].mxu0
  %v483 = vpop.f32.mrb[0].mxu0
  %v484 = vadd.f32 0.0, %v483
  %v485 = vpop.f32.mrb[0].mxu0
  %486 = vmatprep.mubr.bf16.mxu0 0
  %487 = vmatmul.mubr.bf16.gmra.mrb[0].mxu0 %v320
  %v488 = vpop.f32.mrb[0].mxu0
  %v489 = vadd.f32 0.0, %v488
  %v490 = vpop.f32.mrb[0].mxu0
  %v491 = vpop.f32.mrb[0].mxu0
  %v492 = vadd.f32 0.0, %v491
  %v493 = vpop.f32.mrb[0].mxu0
  %494 = vmatprep.mubr.bf16.mxu0 0
  %495 = vmatmul.mubr.bf16.gmra.mrb[0].mxu0 %v323
  %v496 = vpop.f32.mrb[0].mxu0
  %v497 = vadd.f32 0.0, %v496
  %v498 = vpop.f32.mrb[0].mxu0
  %v499 = vpop.f32.mrb[0].mxu0
  %v500 = vadd.f32 0.0, %v499
  %v501 = vpop.f32.mrb[0].mxu0
  %502 = vmatprep.mubr.bf16.mxu0 0
  %503 = vmatmul.mubr.bf16.gmra.mrb[0].mxu0 %v326
  %v504 = vpop.f32.mrb[0].mxu0
  %v505 = vadd.f32 0.0, %v504
  %v506 = vpop.f32.mrb[0].mxu0
  %v507 = vpop.f32.mrb[0].mxu0
  %v508 = vadd.f32 0.0, %v507
  %v509 = vpop.f32.mrb[0].mxu0
  %510 = vmatprep.mubr.bf16.mxu0 0
  %511 = vmatmul.mubr.bf16.gmra.mrb[0].mxu0 %v329
  %v512 = vpop.f32.mrb[0].mxu0
  %v513 = vadd.f32 0.0, %v512
  %v514 = vpop.f32.mrb[0].mxu0
  %v515 = vpop.f32.mrb[0].mxu0
  %v516 = vadd.f32 0.0, %v515
  %v517 = vpop.f32.mrb[0].mxu0
  %518 = vmatprep.mubr.bf16.mxu0 0
  %519 = vmatmul.mubr.bf16.gmra.mrb[0].mxu0 %v332
  %v520 = vpop.f32.mrb[0].mxu0
  %v521 = vadd.f32 0.0, %v520
  %v522 = vpop.f32.mrb[0].mxu0
  %v523 = vpop.f32.mrb[0].mxu0
  %v524 = vadd.f32 0.0, %v523
  %v525 = vpop.f32.mrb[0].mxu0
  %526 = vmatprep.mubr.bf16.mxu0 0
  %527 = vmatmul.mubr.bf16.gmra.mrb[0].mxu0 %v335
  %v528 = vpop.f32.mrb[0].mxu0
  %v529 = vadd.f32 0.0, %v528
  %v530 = vpop.f32.mrb[0].mxu0
  %v531 = vpop.f32.mrb[0].mxu0
  %v532 = vadd.f32 0.0, %v531
  %v533 = vpop.f32.mrb[0].mxu0
  %534 = vmatprep.mubr.bf16.mxu0 0
  %535 = vmatmul.mubr.bf16.gmra.mrb[0].mxu0 %v338
  %v536 = vpop.f32.mrb[0].mxu0
  %v537 = vadd.f32 0.0, %v536
  %v538 = vpop.f32.mrb[0].mxu0
  %v539 = vpop.f32.mrb[0].mxu0
  %v540 = vadd.f32 0.0, %v539
  %v541 = vpop.f32.mrb[0].mxu0
  %542 = vmatprep.mubr.bf16.mxu0 0
  %543 = vmatmul.mubr.bf16.gmra.mrb[0].mxu0 %v341
  %v544 = vpop.f32.mrb[0].mxu0
  %v545 = vadd.f32 0.0, %v544
  %v546 = vpop.f32.mrb[0].mxu0
  %v547 = vpop.f32.mrb[0].mxu0
  %v548 = vadd.f32 0.0, %v547
  %v549 = vpop.f32.mrb[0].mxu0
  %550 = vmatprep.mubr.bf16.mxu0 0
  %551 = vmatmul.mubr.bf16.gmra.mrb[0].mxu0 %v344
  %v552 = vpop.f32.mrb[0].mxu0
  %v553 = vadd.f32 0.0, %v552
  %v554 = vpop.f32.mrb[0].mxu0
  %v555 = vpop.f32.mrb[0].mxu0
  %v556 = vadd.f32 0.0, %v555
  %v557 = vpop.f32.mrb[0].mxu0
  %558 = vmatprep.mubr.bf16.mxu0 0
  %559 = vmatmul.mubr.bf16.gmra.mrb[0].mxu0 %v347
  %v560 = vpop.f32.mrb[0].mxu0
  %v561 = vadd.f32 0.0, %v560
  %v562 = vpop.f32.mrb[0].mxu0
  %v563 = vpop.f32.mrb[0].mxu0
  %v564 = vadd.f32 0.0, %v563
  %v565 = vpop.f32.mrb[0].mxu0
  %566 = vmatprep.mubr.bf16.mxu0 0
  %567 = vmatmul.mubr.bf16.gmra.mrb[0].mxu0 %v350
  %v568 = vpop.f32.mrb[0].mxu0
  %v569 = vadd.f32 0.0, %v568
  %v570 = vpop.f32.mrb[0].mxu0
  %v571 = vpop.f32.mrb[0].mxu0
  %v572 = vadd.f32 0.0, %v571
  %v573 = vpop.f32.mrb[0].mxu0
  %574 = vmatprep.mubr.bf16.mxu0 0
  %575 = vmatmul.mubr.bf16.gmra.mrb[0].mxu0 %v353
  %v576 = vpop.f32.mrb[0].mxu0
  %v577 = vadd.f32 0.0, %v576
  %v578 = vpop.f32.mrb[0].mxu0
  %v579 = vpop.f32.mrb[0].mxu0
  %v580 = vadd.f32 0.0, %v579
  %v581 = vpop.f32.mrb[0].mxu0
  %582 = vmatprep.mubr.bf16.mxu0 0
  %583 = vmatmul.mubr.bf16.gmra.mrb[0].mxu0 %v356
  %v584 = vpop.f32.mrb[0].mxu0
  %v585 = vadd.f32 0.0, %v584
  %v586 = vpop.f32.mrb[0].mxu0
  %v587 = vpop.f32.mrb[0].mxu0
  %v588 = vadd.f32 0.0, %v587
  %v589 = vpop.f32.mrb[0].mxu0
  %590 = vmatprep.mubr.bf16.mxu0 0
  %591 = vmatmul.mubr.bf16.gmra.mrb[0].mxu0 %v359
  %v592 = vpop.f32.mrb[0].mxu0
  %v593 = vadd.f32 0.0, %v592
  %v594 = vpop.f32.mrb[0].mxu0
  %v595 = vpop.f32.mrb[0].mxu0
  %v596 = vadd.f32 0.0, %v595
  %v597 = vpop.f32.mrb[0].mxu0
  %598 = vmatprep.mubr.bf16.mxu0 0
  %599 = vmatmul.mubr.bf16.gmra.mrb[0].mxu0 %v362
  %v600 = vpop.f32.mrb[0].mxu0
  %v601 = vadd.f32 0.0, %v600
  %v602 = vpop.f32.mrb[0].mxu0
  %v603 = vpop.f32.mrb[0].mxu0
  %v604 = vadd.f32 0.0, %v603
  %v605 = vpop.f32.mrb[0].mxu0
  %606 = vmatprep.mubr.bf16.mxu0 0
  %607 = vmatmul.mubr.bf16.gmra.mrb[0].mxu0 %v365
  %v608 = vpop.f32.mrb[0].mxu0
  %v609 = vadd.f32 0.0, %v608
  %v610 = vpop.f32.mrb[0].mxu0
  %v611 = vpop.f32.mrb[0].mxu0
  %v612 = vadd.f32 0.0, %v611
  %v613 = vpop.f32.mrb[0].mxu0
  %614 = vmatprep.mubr.bf16.mxu0 0
  %615 = vmatmul.mubr.bf16.gmra.mrb[0].mxu0 %v368
  %v616 = vpop.f32.mrb[0].mxu0
  %v617 = vadd.f32 0.0, %v616
  %v618 = vpop.f32.mrb[0].mxu0
  %v619 = vpop.f32.mrb[0].mxu0
  %v620 = vadd.f32 0.0, %v619
  %v621 = vpop.f32.mrb[0].mxu0
  %622 = vmatprep.mubr.bf16.mxu0 0
  %623 = vmatmul.mubr.bf16.gmra.mrb[0].mxu0 %v371
  %v624 = vpop.f32.mrb[0].mxu0
  %v625 = vadd.f32 0.0, %v624
  %v626 = vpop.f32.mrb[0].mxu0
  %v627 = vpop.f32.mrb[0].mxu0
  %v628 = vadd.f32 0.0, %v627
  %v629 = vpop.f32.mrb[0].mxu0
  %630 = vmatprep.mubr.bf16.mxu0 0
  %631 = vmatmul.mubr.bf16.gmra.mrb[0].mxu0 %v374
  %v632 = vpop.f32.mrb[0].mxu0
  %v633 = vadd.f32 0.0, %v632
  %v634 = vpop.f32.mrb[0].mxu0
  %v635 = vpop.f32.mrb[0].mxu0
  %v636 = vadd.f32 0.0, %v635
  %v637 = vpop.f32.mrb[0].mxu0
  %638 = vmatprep.mubr.bf16.mxu0 0
  %639 = vmatmul.mubr.bf16.gmra.mrb[0].mxu0 %v377
  %v640 = vpop.f32.mrb[0].mxu0
  %v641 = vadd.f32 0.0, %v640
  %v642 = vpop.f32.mrb[0].mxu0
  %v643 = vpop.f32.mrb[0].mxu0
  %v644 = vadd.f32 0.0, %v643
  %v645 = vpop.f32.mrb[0].mxu0
  %646 = vmatprep.mubr.bf16.mxu0 0
  %647 = vmatmul.mubr.bf16.gmra.mrb[0].mxu0 %v380
  %v648 = vpop.f32.mrb[0].mxu0
  %v649 = vadd.f32 0.0, %v648
  %v650 = vpop.f32.mrb[0].mxu0
  %v651 = vpop.f32.mrb[0].mxu0
  %v652 = vadd.f32 0.0, %v651
  %v653 = vpop.f32.mrb[0].mxu0
  %654 = vmatprep.mubr.bf16.mxu0 0
  %655 = vmatmul.mubr.bf16.gmra.mrb[0].mxu0 %v383
  %v656 = vpop.f32.mrb[0].mxu0
  %v657 = vadd.f32 0.0, %v656
  %v658 = vpop.f32.mrb[0].mxu0
  %v659 = vpop.f32.mrb[0].mxu0
  %v660 = vadd.f32 0.0, %v659
  %v661 = vpop.f32.mrb[0].mxu0
  %662 = vmatprep.mubr.bf16.mxu0 0
  %663 = vmatmul.mubr.bf16.gmra.mrb[0].mxu0 %v386
  %v664 = vpop.f32.mrb[0].mxu0
  %v665 = vadd.f32 0.0, %v664
  %v666 = vpop.f32.mrb[0].mxu0
  %v667 = vpop.f32.mrb[0].mxu0
  %v668 = vadd.f32 0.0, %v667
  %v669 = vpop.f32.mrb[0].mxu0
  %670 = vmatprep.mubr.bf16.mxu0 0
  %671 = vmatmul.mubr.bf16.gmra.mrb[0].mxu0 %v389
  %v672 = vpop.f32.mrb[0].mxu0
  %v673 = vadd.f32 0.0, %v672
  %v674 = vpop.f32.mrb[0].mxu0
  %v675 = vpop.f32.mrb[0].mxu0
  %v676 = vadd.f32 0.0, %v675
  %v677 = vpop.f32.mrb[0].mxu0
  %678 = vmatprep.mubr.bf16.mxu0 0
  %679 = vmatmul.mubr.bf16.gmra.mrb[0].mxu0 %v392
  %v680 = vpop.f32.mrb[0].mxu0
  %v681 = vadd.f32 0.0, %v680
  %v682 = vpop.f32.mrb[0].mxu0
  %v683 = vpop.f32.mrb[0].mxu0
  %v684 = vadd.f32 0.0, %v683
  %v685 = vpop.f32.mrb[0].mxu0
  %686 = vdwg.mxu0
  %v687 = vld [vmem:[%s2] sm:$0x1]
  %v689 = vlaneseq
  %v690 = vshrl.u32 %v689, 7
  %v691 = vsub.s32 0, %v690
  %v692 = vrot.slane %v687, %v691
  %v694 = vmul.f32 %v433, %v692
  %v695 = vmul.f32 %v436, %v692
  %v696 = vmul.f32 %v441, %v692
  %v697 = vmul.f32 %v444, %v692
  %v698 = vmul.f32 %v449, %v692
  %v699 = vmul.f32 %v452, %v692
  %v700 = vmul.f32 %v457, %v692
  %v701 = vmul.f32 %v460, %v692
  %v702 = vmul.f32 %v465, %v692
  %v703 = vmul.f32 %v468, %v692
  %v704 = vmul.f32 %v473, %v692
  %v705 = vmul.f32 %v476, %v692
  %v706 = vmul.f32 %v481, %v692
  %v707 = vmul.f32 %v484, %v692
  %v708 = vmul.f32 %v489, %v692
  %v709 = vmul.f32 %v492, %v692
  %v710 = vmul.f32 %v497, %v692
  %v711 = vmul.f32 %v500, %v692
  %v712 = vmul.f32 %v505, %v692
  %v713 = vmul.f32 %v508, %v692
  %v714 = vmul.f32 %v513, %v692
  %v715 = vmul.f32 %v516, %v692
  %v716 = vmul.f32 %v521, %v692
  %v717 = vmul.f32 %v524, %v692
  %v718 = vmul.f32 %v529, %v692
  %v719 = vmul.f32 %v532, %v692
  %v720 = vmul.f32 %v537, %v692
  %v721 = vmul.f32 %v540, %v692
  %v722 = vmul.f32 %v545, %v692
  %v723 = vmul.f32 %v548, %v692
  %v724 = vmul.f32 %v553, %v692
  %v725 = vmul.f32 %v556, %v692
  %v726 = vmul.f32 %v561, %v692
  %v727 = vmul.f32 %v564, %v692
  %v728 = vmul.f32 %v569, %v692
  %v729 = vmul.f32 %v572, %v692
  %v730 = vmul.f32 %v577, %v692
  %v731 = vmul.f32 %v580, %v692
  %v732 = vmul.f32 %v585, %v692
  %v733 = vmul.f32 %v588, %v692
  %v734 = vmul.f32 %v593, %v692
  %v735 = vmul.f32 %v596, %v692
  %v736 = vmul.f32 %v601, %v692
  %v737 = vmul.f32 %v604, %v692
  %v738 = vmul.f32 %v609, %v692
  %v739 = vmul.f32 %v612, %v692
  %v740 = vmul.f32 %v617, %v692
  %v741 = vmul.f32 %v620, %v692
  %v742 = vmul.f32 %v625, %v692
  %v743 = vmul.f32 %v628, %v692
  %v744 = vmul.f32 %v633, %v692
  %v745 = vmul.f32 %v636, %v692
  %v746 = vmul.f32 %v641, %v692
  %v747 = vmul.f32 %v644, %v692
  %v748 = vmul.f32 %v649, %v692
  %v749 = vmul.f32 %v652, %v692
  %v750 = vmul.f32 %v657, %v692
  %v751 = vmul.f32 %v660, %v692
  %v752 = vmul.f32 %v665, %v692
  %v753 = vmul.f32 %v668, %v692
  %v754 = vmul.f32 %v673, %v692
  %v755 = vmul.f32 %v676, %v692
  %v756 = vmul.f32 %v681, %v692
  %v757 = vmul.f32 %v684, %v692
  %v758 = vld [vmem:[%s3] sm:$0x1]
  %v760 = vlaneseq
  %v761 = vshrl.u32 %v760, 7
  %v762 = vsub.s32 0, %v761
  %v763 = vrot.slane %v758, %v762
  %v765 = vadd.f32 %v694, %v763
  %v766 = vadd.f32 %v695, %v763
  %v767 = vadd.f32 %v696, %v763
  %v768 = vadd.f32 %v697, %v763
  %v769 = vadd.f32 %v698, %v763
  %v770 = vadd.f32 %v699, %v763
  %v771 = vadd.f32 %v700, %v763
  %v772 = vadd.f32 %v701, %v763
  %v773 = vadd.f32 %v702, %v763
  %v774 = vadd.f32 %v703, %v763
  %v775 = vadd.f32 %v704, %v763
  %v776 = vadd.f32 %v705, %v763
  %v777 = vadd.f32 %v706, %v763
  %v778 = vadd.f32 %v707, %v763
  %v779 = vadd.f32 %v708, %v763
  %v780 = vadd.f32 %v709, %v763
  %v781 = vadd.f32 %v710, %v763
  %v782 = vadd.f32 %v711, %v763
  %v783 = vadd.f32 %v712, %v763
  %v784 = vadd.f32 %v713, %v763
  %v785 = vadd.f32 %v714, %v763
  %v786 = vadd.f32 %v715, %v763
  %v787 = vadd.f32 %v716, %v763
  %v788 = vadd.f32 %v717, %v763
  %v789 = vadd.f32 %v718, %v763
  %v790 = vadd.f32 %v719, %v763
  %v791 = vadd.f32 %v720, %v763
  %v792 = vadd.f32 %v721, %v763
  %v793 = vadd.f32 %v722, %v763
  %v794 = vadd.f32 %v723, %v763
  %v795 = vadd.f32 %v724, %v763
  %v796 = vadd.f32 %v725, %v763
  %v797 = vadd.f32 %v726, %v763
  %v798 = vadd.f32 %v727, %v763
  %v799 = vadd.f32 %v728, %v763
  %v800 = vadd.f32 %v729, %v763
  %v801 = vadd.f32 %v730, %v763
  %v802 = vadd.f32 %v731, %v763
  %v803 = vadd.f32 %v732, %v763
  %v804 = vadd.f32 %v733, %v763
  %v805 = vadd.f32 %v734, %v763
  %v806 = vadd.f32 %v735, %v763
  %v807 = vadd.f32 %v736, %v763
  %v808 = vadd.f32 %v737, %v763
  %v809 = vadd.f32 %v738, %v763
  %v810 = vadd.f32 %v739, %v763
  %v811 = vadd.f32 %v740, %v763
  %v812 = vadd.f32 %v741, %v763
  %v813 = vadd.f32 %v742, %v763
  %v814 = vadd.f32 %v743, %v763
  %v815 = vadd.f32 %v744, %v763
  %v816 = vadd.f32 %v745, %v763
  %v817 = vadd.f32 %v746, %v763
  %v818 = vadd.f32 %v747, %v763
  %v819 = vadd.f32 %v748, %v763
  %v820 = vadd.f32 %v749, %v763
  %v821 = vadd.f32 %v750, %v763
  %v822 = vadd.f32 %v751, %v763
  %v823 = vadd.f32 %v752, %v763
  %v824 = vadd.f32 %v753, %v763
  %v825 = vadd.f32 %v754, %v763
  %v826 = vadd.f32 %v755, %v763
  %v827 = vadd.f32 %v756, %v763
  %v828 = vadd.f32 %v757, %v763
  %v829 = vmax.f32 %v765, 0.0
  %v830 = vmax.f32 %v766, 0.0
  %v831 = vmax.f32 %v767, 0.0
  %v832 = vmax.f32 %v768, 0.0
  %v833 = vmax.f32 %v769, 0.0
  %v834 = vmax.f32 %v770, 0.0
  %v835 = vmax.f32 %v771, 0.0
  %v836 = vmax.f32 %v772, 0.0
  %v837 = vmax.f32 %v773, 0.0
  %v838 = vmax.f32 %v774, 0.0
  %v839 = vmax.f32 %v775, 0.0
  %v840 = vmax.f32 %v776, 0.0
  %v841 = vmax.f32 %v777, 0.0
  %v842 = vmax.f32 %v778, 0.0
  %v843 = vmax.f32 %v779, 0.0
  %v844 = vmax.f32 %v780, 0.0
  %v845 = vmax.f32 %v781, 0.0
  %v846 = vmax.f32 %v782, 0.0
  %v847 = vmax.f32 %v783, 0.0
  %v848 = vmax.f32 %v784, 0.0
  %v849 = vmax.f32 %v785, 0.0
  %v850 = vmax.f32 %v786, 0.0
  %v851 = vmax.f32 %v787, 0.0
  %v852 = vmax.f32 %v788, 0.0
  %v853 = vmax.f32 %v789, 0.0
  %v854 = vmax.f32 %v790, 0.0
  %v855 = vmax.f32 %v791, 0.0
  %v856 = vmax.f32 %v792, 0.0
  %v857 = vmax.f32 %v793, 0.0
  %v858 = vmax.f32 %v794, 0.0
  %v859 = vmax.f32 %v795, 0.0
  %v860 = vmax.f32 %v796, 0.0
  %v861 = vmax.f32 %v797, 0.0
  %v862 = vmax.f32 %v798, 0.0
  %v863 = vmax.f32 %v799, 0.0
  %v864 = vmax.f32 %v800, 0.0
  %v865 = vmax.f32 %v801, 0.0
  %v866 = vmax.f32 %v802, 0.0
  %v867 = vmax.f32 %v803, 0.0
  %v868 = vmax.f32 %v804, 0.0
  %v869 = vmax.f32 %v805, 0.0
  %v870 = vmax.f32 %v806, 0.0
  %v871 = vmax.f32 %v807, 0.0
  %v872 = vmax.f32 %v808, 0.0
  %v873 = vmax.f32 %v809, 0.0
  %v874 = vmax.f32 %v810, 0.0
  %v875 = vmax.f32 %v811, 0.0
  %v876 = vmax.f32 %v812, 0.0
  %v877 = vmax.f32 %v813, 0.0
  %v878 = vmax.f32 %v814, 0.0
  %v879 = vmax.f32 %v815, 0.0
  %v880 = vmax.f32 %v816, 0.0
  %v881 = vmax.f32 %v817, 0.0
  %v882 = vmax.f32 %v818, 0.0
  %v883 = vmax.f32 %v819, 0.0
  %v884 = vmax.f32 %v820, 0.0
  %v885 = vmax.f32 %v821, 0.0
  %v886 = vmax.f32 %v822, 0.0
  %v887 = vmax.f32 %v823, 0.0
  %v888 = vmax.f32 %v824, 0.0
  %v889 = vmax.f32 %v825, 0.0
  %v890 = vmax.f32 %v826, 0.0
  %v891 = vmax.f32 %v827, 0.0
  %v892 = vmax.f32 %v828, 0.0
  %vm893 = vcmask 130048
  %894 = vst.msk [vmem:[%s4] sm:$0xff] %vm893, %v829
  %895 = vst.msk [vmem:[%s4 + $0x8] sm:$0xff] %vm893, %v830
  %896 = vst.msk [vmem:[%s4 + $0x10] sm:$0xff] %vm893, %v831
  %897 = vst.msk [vmem:[%s4 + $0x18] sm:$0xff] %vm893, %v832
  %898 = vst.msk [vmem:[%s4 + $0x20] sm:$0xff] %vm893, %v833
  %899 = vst.msk [vmem:[%s4 + $0x28] sm:$0xff] %vm893, %v834
  %900 = vst.msk [vmem:[%s4 + $0x30] sm:$0xff] %vm893, %v835
  %901 = vst.msk [vmem:[%s4 + $0x38] sm:$0xff] %vm893, %v836
  %902 = vst.msk [vmem:[%s4 + $0x40] sm:$0xff] %vm893, %v837
  %903 = vst.msk [vmem:[%s4 + $0x48] sm:$0xff] %vm893, %v838
  %904 = vst.msk [vmem:[%s4 + $0x50] sm:$0xff] %vm893, %v839
  %905 = vst.msk [vmem:[%s4 + $0x58] sm:$0xff] %vm893, %v840
  %906 = vst.msk [vmem:[%s4 + $0x60] sm:$0xff] %vm893, %v841
  %907 = vst.msk [vmem:[%s4 + $0x68] sm:$0xff] %vm893, %v842
  %908 = vst.msk [vmem:[%s4 + $0x70] sm:$0xff] %vm893, %v843
  %909 = vst.msk [vmem:[%s4 + $0x78] sm:$0xff] %vm893, %v844
  %910 = vst.msk [vmem:[%s4 + $0x80] sm:$0xff] %vm893, %v845
  %911 = vst.msk [vmem:[%s4 + $0x88] sm:$0xff] %vm893, %v846
  %912 = vst.msk [vmem:[%s4 + $0x90] sm:$0xff] %vm893, %v847
  %913 = vst.msk [vmem:[%s4 + $0x98] sm:$0xff] %vm893, %v848
  %914 = vst.msk [vmem:[%s4 + $0xa0] sm:$0xff] %vm893, %v849
  %915 = vst.msk [vmem:[%s4 + $0xa8] sm:$0xff] %vm893, %v850
  %916 = vst.msk [vmem:[%s4 + $0xb0] sm:$0xff] %vm893, %v851
  %917 = vst.msk [vmem:[%s4 + $0xb8] sm:$0xff] %vm893, %v852
  %918 = vst.msk [vmem:[%s4 + $0xc0] sm:$0xff] %vm893, %v853
  %919 = vst.msk [vmem:[%s4 + $0xc8] sm:$0xff] %vm893, %v854
  %920 = vst.msk [vmem:[%s4 + $0xd0] sm:$0xff] %vm893, %v855
  %921 = vst.msk [vmem:[%s4 + $0xd8] sm:$0xff] %vm893, %v856
  %922 = vst.msk [vmem:[%s4 + $0xe0] sm:$0xff] %vm893, %v857
  %923 = vst.msk [vmem:[%s4 + $0xe8] sm:$0xff] %vm893, %v858
  %924 = vst.msk [vmem:[%s4 + $0xf0] sm:$0xff] %vm893, %v859
  %925 = vst.msk [vmem:[%s4 + $0xf8] sm:$0xff] %vm893, %v860
  %926 = vst.msk [vmem:[%s4 + $0x100] sm:$0xff] %vm893, %v861
  %927 = vst.msk [vmem:[%s4 + $0x108] sm:$0xff] %vm893, %v862
  %928 = vst.msk [vmem:[%s4 + $0x110] sm:$0xff] %vm893, %v863
  %929 = vst.msk [vmem:[%s4 + $0x118] sm:$0xff] %vm893, %v864
  %930 = vst.msk [vmem:[%s4 + $0x120] sm:$0xff] %vm893, %v865
  %931 = vst.msk [vmem:[%s4 + $0x128] sm:$0xff] %vm893, %v866
  %932 = vst.msk [vmem:[%s4 + $0x130] sm:$0xff] %vm893, %v867
  %933 = vst.msk [vmem:[%s4 + $0x138] sm:$0xff] %vm893, %v868
  %934 = vst.msk [vmem:[%s4 + $0x140] sm:$0xff] %vm893, %v869
  %935 = vst.msk [vmem:[%s4 + $0x148] sm:$0xff] %vm893, %v870
  %936 = vst.msk [vmem:[%s4 + $0x150] sm:$0xff] %vm893, %v871
  %937 = vst.msk [vmem:[%s4 + $0x158] sm:$0xff] %vm893, %v872
  %938 = vst.msk [vmem:[%s4 + $0x160] sm:$0xff] %vm893, %v873
  %939 = vst.msk [vmem:[%s4 + $0x168] sm:$0xff] %vm893, %v874
  %940 = vst.msk [vmem:[%s4 + $0x170] sm:$0xff] %vm893, %v875
  %941 = vst.msk [vmem:[%s4 + $0x178] sm:$0xff] %vm893, %v876
  %942 = vst.msk [vmem:[%s4 + $0x180] sm:$0xff] %vm893, %v877
  %943 = vst.msk [vmem:[%s4 + $0x188] sm:$0xff] %vm893, %v878
  %944 = vst.msk [vmem:[%s4 + $0x190] sm:$0xff] %vm893, %v879
  %945 = vst.msk [vmem:[%s4 + $0x198] sm:$0xff] %vm893, %v880
  %946 = vst.msk [vmem:[%s4 + $0x1a0] sm:$0xff] %vm893, %v881
  %947 = vst.msk [vmem:[%s4 + $0x1a8] sm:$0xff] %vm893, %v882
  %948 = vst.msk [vmem:[%s4 + $0x1b0] sm:$0xff] %vm893, %v883
  %949 = vst.msk [vmem:[%s4 + $0x1b8] sm:$0xff] %vm893, %v884
  %950 = vst.msk [vmem:[%s4 + $0x1c0] sm:$0xff] %vm893, %v885
  %951 = vst.msk [vmem:[%s4 + $0x1c8] sm:$0xff] %vm893, %v886
  %952 = vst.msk [vmem:[%s4 + $0x1d0] sm:$0xff] %vm893, %v887
  %953 = vst.msk [vmem:[%s4 + $0x1d8] sm:$0xff] %vm893, %v888
  %954 = vst.msk [vmem:[%s4 + $0x1e0] sm:$0xff] %vm893, %v889
  %955 = vst.msk [vmem:[%s4 + $0x1e8] sm:$0xff] %vm893, %v890
  %956 = vst.msk [vmem:[%s4 + $0x1f0] sm:$0xff] %vm893, %v891
  %957 = vst.msk [vmem:[%s4 + $0x1f8] sm:$0xff] %vm893, %v892
  // Predicated region
  $region18: #{tpu_custom_call.1} parent=0 // pred_check
    _
  $region19: #{tpu_custom_call.1} parent=0 // pred_check_branch
    %959 = sbr.rel (0) target = $region21
  $region20: #{tpu_custom_call.1} parent=0 // pred_region
    _
  $region21: #{tpu_custom_call.1} parent=0 // pred_fallthru
    _
  // Predicated region
  $region22: #{tpu_custom_call.1} parent=0 // pred_check
    _
  $region23: #{tpu_custom_call.1} parent=0 // pred_check_branch
    %961 = sbr.rel (0) target = $region25
  $region24: #{tpu_custom_call.1} parent=0 // pred_region
    _
  $region25: #{tpu_custom_call.1} parent=0 // pred_fallthru
    _

</llo_original>
